<compile_context>
chip_gen: v6e
topology: v6e:2x2x1
jax: 0.10.0
libtpu: 0.0.40
codegen_flags: <defaults>
</compile_context>

<pallas_src>
import jax
import jax.numpy as jnp
from jax.experimental import pallas as pl
from jax.experimental.pallas import tpu as pltpu


def _state_update_kernel(x_ref, wt_ref, b_ref, o_ref):
    # x_ref : (tm, D_in)      -- tile of flattened inputs (all leading dims folded into M)
    # wt_ref: (D_in, D_out_p) -- pre-transposed, lane-padded weight (grid-invariant)
    # b_ref : (1, D_out_p)    -- lane-padded bias (grid-invariant)
    # o_ref : (tm, D_out_p)   -- lane-dense output tile
    acc = jnp.dot(x_ref[...], wt_ref[...], preferred_element_type=jnp.float32)
    o_ref[...] = (acc + b_ref[...]).astype(o_ref.dtype)


def state_update_forward(x, weight, bias, *, tile_m=256):
    """Forward of StateUpdateFunction: x @ weight.T + bias applied over the last dim.

    x:      (..., in_features)  float32
    weight: (out_features, in_features)  (PyTorch nn.Linear layout)
    bias:   (out_features,)
    """
    *lead, d_in = x.shape
    d_out = weight.shape[0]
    m = 1
    for s in lead:
        m *= int(s)

    # Fold every leading dim into the matmul M dim (free reshape: contiguous).
    x2 = x.reshape(m, d_in)

    # Pre-transpose the weight once (kernel does x @ Wt -- no in-kernel transpose) and
    # pad the output/lane dim to a multiple of 128 so stores are unmasked / lane-dense.
    d_out_pad = pl.cdiv(d_out, 128) * 128
    wt = weight.T
    b2 = bias.reshape(1, d_out)
    if d_out_pad != d_out:
        wt = jnp.pad(wt, ((0, 0), (0, d_out_pad - d_out)))
        b2 = jnp.pad(b2, ((0, 0), (0, d_out_pad - d_out)))

    # Tile along M: a single grid step when the problem is small (single-TC v5e/v6e get
    # no benefit from more steps); tile_m-row tiles on a "parallel" axis otherwise so
    # dual-TC v7x shards the work across both cores.
    tm = m if m <= tile_m else tile_m
    tm = max(8, pl.cdiv(tm, 8) * 8)           # sublane-aligned tile
    m_pad = pl.cdiv(m, tm) * tm
    if m_pad != m:
        x2 = jnp.pad(x2, ((0, m_pad - m), (0, 0)))

    grid = (m_pad // tm,)

    out = pl.pallas_call(
        _state_update_kernel,
        out_shape=jax.ShapeDtypeStruct((m_pad, d_out_pad), x.dtype),
        grid_spec=pltpu.PrefetchScalarGridSpec(
            num_scalar_prefetch=0,
            grid=grid,
            in_specs=[
                pl.BlockSpec((tm, d_in), lambda i: (i, 0)),           # input rows (tiled over M)
                pl.BlockSpec((d_in, d_out_pad), lambda i: (0, 0)),    # weight (grid-invariant)
                pl.BlockSpec((1, d_out_pad), lambda i: (0, 0)),       # bias   (grid-invariant)
            ],
            out_specs=pl.BlockSpec((tm, d_out_pad), lambda i: (i, 0)),
        ),
        compiler_params=pltpu.CompilerParams(
            dimension_semantics=("parallel",),
        ),
        cost_estimate=pl.CostEstimate(
            flops=2 * m_pad * d_in * d_out_pad,
            transcendentals=0,
            bytes_accessed=4 * (m_pad * d_in + d_in * d_out_pad + d_out_pad
                                + m_pad * d_out_pad),
        ),
    )(x2, wt, b2)

    # Strip the M / lane padding and restore the leading dims.
    return out[:m, :d_out].reshape(*lead, d_out)


def reference_forward(x, weight, bias):
    return jnp.matmul(x, weight.T) + bias


if __name__ == "__main__":
    key = jax.random.PRNGKey(0)

    # Small shapes consistent with the module: (batch, num_neurons, in_features) -> out_features.
    B, N = 2, 8
    in_features, out_features = 48, 32

    k1, k2, k3 = jax.random.split(key, 3)

    # Deterministic nn.Linear-style init: U(-1/sqrt(in), 1/sqrt(in)).
    bound = 1.0 / (in_features ** 0.5)
    weight = jax.random.uniform(k1, (out_features, in_features), jnp.float32, -bound, bound)
    bias = jax.random.uniform(k2, (out_features,), jnp.float32, -bound, bound)

    x = jax.random.normal(k3, (B, N, in_features), jnp.float32)

    out = state_update_forward(x, weight, bias)
    out = jax.block_until_ready(out)

    ref = reference_forward(x, weight, bias)
    assert out.shape == (B, N, out_features), f"bad shape {out.shape}"
    assert jnp.allclose(out, ref, atol=1e-4, rtol=1e-4), "mismatch vs reference"

    print("KERNEL_OK")
</pallas_src>

<mosaic_0001>
module attributes {stable_mosaic.version = 11 : i64} {
  func.func @_state_update_kernel(%arg0: i32, %arg1: memref<16x48xf32, #tpu.memory_space<vmem>>, %arg2: memref<48x128xf32, #tpu.memory_space<vmem>>, %arg3: memref<1x128xf32, #tpu.memory_space<vmem>>, %arg4: memref<16x128xf32, #tpu.memory_space<vmem>>) attributes {dimension_semantics = [#tpu.dimension_semantics<parallel>], iteration_bounds = array<i64: 1>, scalar_prefetch = 0 : i64, scratch_operands = 0 : i64, tpu.core_type = #tpu.core_type<tc>, window_params = [{transform_indices = @transform_0, window_bounds = array<i64: 16, 48>}, {pipeline_mode = #tpu.pipeline_mode<synchronous>, transform_indices = @transform_1, window_bounds = array<i64: 48, 128>}, {pipeline_mode = #tpu.pipeline_mode<synchronous>, transform_indices = @transform_2, window_bounds = array<i64: 1, 128>}, {transform_indices = @transform_3, window_bounds = array<i64: 16, 128>}]} {
    %c0 = arith.constant 0 : index
    %c0_0 = arith.constant 0 : index
    %0 = vector.load %arg1[%c0, %c0_0] : memref<16x48xf32, #tpu.memory_space<vmem>>, vector<16x48xf32>
    %c0_1 = arith.constant 0 : index
    %c0_2 = arith.constant 0 : index
    %1 = vector.load %arg2[%c0_1, %c0_2] : memref<48x128xf32, #tpu.memory_space<vmem>>, vector<48x128xf32>
    %cst = arith.constant dense<0.000000e+00> : vector<16x128xf32>
    %2 = tpu.matmul %0, %1, %cst {dimension_numbers = #tpu.dot_dimension_numbers<[1], [0], [0], [1], [0, 0, 1, 1], [], []>} : vector<16x48xf32>, vector<48x128xf32>, vector<16x128xf32> -> vector<16x128xf32>
    %c0_3 = arith.constant 0 : index
    %c0_4 = arith.constant 0 : index
    %3 = vector.load %arg3[%c0_3, %c0_4] : memref<1x128xf32, #tpu.memory_space<vmem>>, vector<1x128xf32>
    %4 = vector.broadcast %3 : vector<1x128xf32> to vector<16x128xf32>
    %5 = arith.addf %2, %4 : vector<16x128xf32>
    %c0_5 = arith.constant 0 : index
    %c0_6 = arith.constant 0 : index
    %6 = vector.load %arg4[%c0_5, %c0_6] : memref<16x128xf32, #tpu.memory_space<vmem>>, vector<16x128xf32>
    tpu.vector_store %arg4[%c0_5, %c0_6], %5 {strides = array<i32>} : memref<16x128xf32, #tpu.memory_space<vmem>>, vector<16x128xf32>,
    return
  }
  func.func @transform_0(%arg0: i32) -> (i32, i32) {
    %c0_i32 = arith.constant 0 : i32
    %c0_i32_0 = arith.constant 0 : i32
    return %arg0, %c0_i32 : i32, i32
  }
  func.func @transform_1(%arg0: i32) -> (i32, i32) {
    %c0_i32 = arith.constant 0 : i32
    %c0_i32_0 = arith.constant 0 : i32
    %c0_i32_1 = arith.constant 0 : i32
    return %c0_i32, %c0_i32_0 : i32, i32
  }
  func.func @transform_2(%arg0: i32) -> (i32, i32) {
    %c0_i32 = arith.constant 0 : i32
    %c0_i32_0 = arith.constant 0 : i32
    %c0_i32_1 = arith.constant 0 : i32
    return %c0_i32, %c0_i32_0 : i32, i32
  }
  func.func @transform_3(%arg0: i32) -> (i32, i32) {
    %c0_i32 = arith.constant 0 : i32
    %c0_i32_0 = arith.constant 0 : i32
    return %arg0, %c0_i32 : i32, i32
  }
}

</mosaic_0001>

<llo_original>
// kernel: tpu_custom_call.1
$region0: #{tpu_custom_call.1}
  #allocation0 [shape = 'u32[]', space=smem, size = 0x4, offset = 0x4, fixed_abs, tag = 'smem constant byte address 0x4 - core index']
  #allocation1 [shape = 'u32[144,128]{1,0:T(1,128)}', space=vmem, size = 0x12000, scoped, tag = 'internal scratch']
  %s0 = inlined_call_operand.hbm [shape: f32[16,48], index: 0, kind: input, shape index: {}]
  %s1 = inlined_call_operand.hbm [shape: f32[48,128], index: 1, kind: input, shape index: {}]
  %s2 = inlined_call_operand.vmem [shape: f32[1,128], index: 2, kind: input, shape index: {}]
  %s3 = inlined_call_operand.hbm [shape: f32[16,128], index: 3, kind: output, shape index: {}]
  %s4 = sld [smem:[#allocation0]]
  $region30: #{tpu_custom_call.1} parent=0
    _
  %s6 = ssub.s32 1, %s4
  %s7 = scalar_select 0, %s6, %s4
  $region1: #{tpu_custom_call.1} parent=0
    #allocation2 [shape = 'u8[8192]{0}', space=vmem, size = 0x2000, scoped, tag = 'input window, operand 0, single buffered']
    #allocation3 [shape = 's32[1]{0}', space=sflag, size = 0x4, scoped, tag = 'scoped memory for tpu_custom_call.1']
    #allocation4 [shape = 's32[1]{0}', space=sflag, size = 0x4, scoped, tag = 'scoped memory for tpu_custom_call.1']
    #allocation5 [shape = 'u8[24576]{0}', space=vmem, size = 0x6000, scoped, tag = 'input window, operand 1, single buffered']
    #allocation6 [shape = 's32[1]{0}', space=sflag, size = 0x4, scoped, tag = 'scoped memory for tpu_custom_call.1']
    #allocation7 [shape = 'u8[8192]{0}', space=vmem, size = 0x2000, scoped, tag = 'output window, operand 0, single buffered']
    %8 = vsyncpa [#allocation3], 0
    %9 = vsyncpa [#allocation6], 0
    %10 = vsyncpa [#allocation4], 0
    // Predicated region
    $region2: #{tpu_custom_call.1} parent=1 // pred_check
      _
    $region3: #{tpu_custom_call.1} parent=1 // pred_check_branch
      %12 = sbr.rel (0) target = $region5
    $region4: #{tpu_custom_call.1} parent=1 // pred_region
      %s14 = ssub.s32 256, 256
      %15 = vsyncadd [#allocation3], %s14
      %s16 = sshll.u32 [#allocation2], 4
      %s17 = int_to_ptr.vmem [resolvable:$true] %s16
      %22 = dma.hbm_to_vmem [thread:$0]  %s0, 256, %s17, [#allocation3], 128, 128, 8
    $region5: #{tpu_custom_call.1} parent=1 // pred_fallthru
      _
    // Predicated region
    $region6: #{tpu_custom_call.1} parent=1 // pred_check
      _
    $region7: #{tpu_custom_call.1} parent=1 // pred_check_branch
      %24 = sbr.rel (0) target = $region9
    $region8: #{tpu_custom_call.1} parent=1 // pred_region
      %s26 = ssub.s32 768, 768
      %27 = vsyncadd [#allocation6], %s26
      %s28 = sshll.u32 [#allocation5], 4
      %s29 = int_to_ptr.vmem [resolvable:$true] %s28
      %34 = dma.hbm_to_vmem [thread:$0]  %s1, 768, %s29, [#allocation6], 128, 128, 8
    $region9: #{tpu_custom_call.1} parent=1 // pred_fallthru
      _
    // Predicated region
    $region10: #{tpu_custom_call.1} parent=1 // pred_check
      _
    $region11: #{tpu_custom_call.1} parent=1 // pred_check_branch
      %36 = sbr.rel (0) target = $region13
    $region12: #{tpu_custom_call.1} parent=1 // pred_region
      _
    $region13: #{tpu_custom_call.1} parent=1 // pred_fallthru
      _
    // Predicated region
    $region14: #{tpu_custom_call.1} parent=1 // pred_check
      _
    $region15: #{tpu_custom_call.1} parent=1 // pred_check_branch
      %38 = sbr.rel (0) target = $region17
    $region16: #{tpu_custom_call.1} parent=1 // pred_region
      %39 = dma.done [#allocation3], 256
    $region17: #{tpu_custom_call.1} parent=1 // pred_fallthru
      _
    // Predicated region
    $region18: #{tpu_custom_call.1} parent=1 // pred_check
      _
    $region19: #{tpu_custom_call.1} parent=1 // pred_check_branch
      %41 = sbr.rel (0) target = $region21
    $region20: #{tpu_custom_call.1} parent=1 // pred_region
      %42 = dma.done [#allocation6], 768
    $region21: #{tpu_custom_call.1} parent=1 // pred_fallthru
      _
    %v43 = vld [vmem:[#allocation2] sm:$0xff]
    %v44 = vld [vmem:[#allocation2 + $0x8] sm:$0xff]
    %v45 = vld [vmem:[#allocation5] sm:$0xff]
    %v46 = vld [vmem:[#allocation5 + $0x8] sm:$0xff]
    %v47 = vld [vmem:[#allocation5 + $0x10] sm:$0xff]
    %v48 = vld [vmem:[#allocation5 + $0x18] sm:$0xff]
    %v49 = vld [vmem:[#allocation5 + $0x20] sm:$0xff]
    %v50 = vld [vmem:[#allocation5 + $0x28] sm:$0xff]
    %v51 = vld [vmem:[%s2] sm:$0x1]
    %v53 = vlaneseq
    %v54 = vshrl.u32 %v53, 7
    %v55 = vsub.s32 0, %v54
    %v56 = vrot.slane %v51, %v55
    %vm58 = vcmask 392192
    %v60 = vsel %vm58, %v43, 0
    %v63 = vsel %vm58, %v44, 0
    %65 = vmatprep.subr.mxu0 0.0
    %66 = vmatpush1.msra.mxu0 0.0
    %67 = vmatprep.subr.mxu0 0.0
    %68 = vmatpush1.msra.mxu0 0.0
    %69 = vmatprep.subr.mxu0 0.0
    %70 = vmatpush1.msra.mxu0 0.0
    %71 = vmatprep.subr.mxu0 0.0
    %72 = vmatpush1.msra.mxu0 0.0
    %73 = vmatprep.subr.mxu0 0.0
    %74 = vmatpush1.msra.mxu0 0.0
    %75 = vmatprep.subr.mxu0 0.0
    %76 = vmatpush1.msra.mxu0 0.0
    %77 = vmatprep.subr.mxu0 0.0
    %78 = vmatpush1.msra.mxu0 0.0
    %79 = vmatprep.subr.mxu0 0.0
    %80 = vmatpush1.msra.mxu0 0.0
    %81 = vmatprep.subr.mxu0 0.0
    %82 = vmatpush1.msra.mxu0 0.0
    %83 = vmatprep.subr.mxu0 0.0
    %84 = vmatpush1.msra.mxu0 0.0
    %85 = vmatprep.subr.mxu0 0.0
    %86 = vmatpush1.msra.mxu0 %v50
    %87 = vmatprep.subr.mxu0 0.0
    %88 = vmatpush1.msra.mxu0 %v49
    %89 = vmatprep.subr.mxu0 0.0
    %90 = vmatpush1.msra.mxu0 %v48
    %91 = vmatprep.subr.mxu0 0.0
    %92 = vmatpush1.msra.mxu0 %v47
    %93 = vmatprep.subr.mxu0 0.0
    %94 = vmatpush1.msra.mxu0 %v46
    %95 = vmatprep.subr.mxu0 0.0
    %96 = vmatpush1.msra.mxu0 %v45
    %97 = vmatprep.subr.mxu0 0.0
    %98 = vmatpush2.msra.mxu0 0.0
    %99 = vmatprep.subr.mxu0 0.0
    %100 = vmatpush2.msra.mxu0 0.0
    %101 = vmatprep.subr.mxu0 0.0
    %102 = vmatpush2.msra.mxu0 0.0
    %103 = vmatprep.subr.mxu0 0.0
    %104 = vmatpush2.msra.mxu0 0.0
    %105 = vmatprep.subr.mxu0 0.0
    %106 = vmatpush2.msra.mxu0 0.0
    %107 = vmatprep.subr.mxu0 0.0
    %108 = vmatpush2.msra.mxu0 0.0
    %109 = vmatprep.subr.mxu0 0.0
    %110 = vmatpush2.msra.mxu0 0.0
    %111 = vmatprep.subr.mxu0 0.0
    %112 = vmatpush2.msra.mxu0 0.0
    %113 = vmatprep.subr.mxu0 0.0
    %114 = vmatpush2.msra.mxu0 0.0
    %115 = vmatprep.subr.mxu0 0.0
    %116 = vmatpush2.msra.mxu0 0.0
    %117 = vmatprep.subr.mxu0 0.0
    %118 = vmatpush2.msra.mxu0 0.0
    %119 = vmatprep.subr.mxu0 0.0
    %120 = vmatpush2.msra.mxu0 0.0
    %121 = vmatprep.subr.mxu0 0.0
    %122 = vmatpush2.msra.mxu0 0.0
    %123 = vmatprep.subr.mxu0 0.0
    %124 = vmatpush2.msra.mxu0 0.0
    %125 = vmatprep.subr.mxu0 0.0
    %126 = vmatpush2.msra.mxu0 0.0
    %127 = vmatprep.subr.mxu0 0.0
    %128 = vmatpush2.msra.mxu0 0.0
    %129 = vmatprep.mubr.f32.mxu0 0.0
    %130 = vmatmul.mubr.f32.gmra.mxu0 %v60
    %v131 = vpop.f32.mrf.mxu0
    %v132 = vadd.f32 %v56, %v131
    %v133 = vpop.f32.mrf.mxu0
    %134 = vmatprep.mubr.f32.mxu0 0.0
    %135 = vmatmul.mubr.f32.gmra.mxu0 %v63
    %v136 = vpop.f32.mrf.mxu0
    %v137 = vadd.f32 %v56, %v136
    %v138 = vpop.f32.mrf.mxu0
    %139 = vdwg.mxu0
    %140 = vst [vmem:[#allocation7] sm:$0xff] %v132
    %141 = vst [vmem:[#allocation7 + $0x8] sm:$0xff] %v137
    // Predicated region
    $region22: #{tpu_custom_call.1} parent=1 // pred_check
      _
    $region23: #{tpu_custom_call.1} parent=1 // pred_check_branch
      %143 = sbr.rel (0) target = $region25
    $region24: #{tpu_custom_call.1} parent=1 // pred_region
      %s145 = ssub.s32 256, 256
      %146 = vsyncadd [#allocation4], %s145
      %s147 = sshll.u32 [#allocation7], 4
      %s148 = int_to_ptr.vmem [resolvable:$true] %s147
      %153 = dma.vmem_to_hbm [thread:$0]  %s148, 256, %s3, [#allocation4], 128, 128, 8
    $region25: #{tpu_custom_call.1} parent=1 // pred_fallthru
      _
    // Predicated region
    $region26: #{tpu_custom_call.1} parent=1 // pred_check
      _
    $region27: #{tpu_custom_call.1} parent=1 // pred_check_branch
      %155 = sbr.rel (0) target = $region29
    $region28: #{tpu_custom_call.1} parent=1 // pred_region
      %156 = dma.done [#allocation4], 256
    $region29: #{tpu_custom_call.1} parent=1 // pred_fallthru
      _
    %157 = vsyncpa [#allocation3], 1
    %158 = vsyncpa [#allocation6], 1
    %159 = vsyncpa [#allocation4], 1

</llo_original>
